<compile_context>
chip_gen: v6e
topology: v6e:2x2x1
jax: 0.10.0
libtpu: 0.0.40
codegen_flags: <defaults>
</compile_context>

<pallas_src>
import jax
import jax.numpy as jnp
from jax import lax
from jax.experimental import pallas as pl
from jax.experimental.pallas import tpu as pltpu


def _round_up(x, m):
    return ((x + m - 1) // m) * m


def _cdiv(a, b):
    return (a + b - 1) // b


def _pad2(a, rows, cols):
    pr, pc = rows - a.shape[0], cols - a.shape[1]
    if pr == 0 and pc == 0:
        return a
    return jnp.pad(a, ((0, pr), (0, pc)))


def _pick_tile(dim, pref, align, min_blocks=1):
    """Choose (tile, padded_dim) so padded_dim = n_blocks * tile, tile is a
    multiple of `align`, overshoot stays small, and n_blocks >= min_blocks."""
    nb = max(_cdiv(dim, pref), min_blocks)
    tile = _round_up(_cdiv(dim, nb), align)
    return tile, nb * tile


def lora_linear_kernel(alpha_ref, x_ref, w_ref, bias_ref, xa_ref, b_ref,
                       o_ref, acc_ref):
    k = pl.program_id(2)

    # Base linear partial product for this K step: x_tile @ W_tile^T.
    # W block is (tn, tk) in PyTorch (out, in) layout; contract the last dims
    # ("NT" matmul) so W^T is never materialized. bf16 MXU, f32 accumulate.
    partial = lax.dot_general(
        x_ref[...], w_ref[...],
        dimension_numbers=(((1,), (1,)), ((), ())),
        preferred_element_type=jnp.float32)

    @pl.when(k == 0)
    def _():
        # Fold the bias into the accumulator init (saves a zero-fill pass).
        acc_ref[...] = partial + bias_ref[...]

    @pl.when(k > 0)
    def _():
        acc_ref[...] += partial

    @pl.when(k == pl.num_programs(2) - 1)
    def _():
        # Tiny LoRA up-projection once per output tile (f32 in, f32 acc),
        # then f32 epilogue on the VPU.
        lora = jnp.dot(xa_ref[...], b_ref[...],
                       preferred_element_type=jnp.float32)
        o_ref[...] = (acc_ref[...] + alpha_ref[0, 0] * lora).astype(o_ref.dtype)


def prepare_lora_params(w, bias, A, B, *, tn=512, tk=1024):
    """One-time (per layer) padding + casting of parameters.

    w: (out_dim, in_dim) [PyTorch nn.Linear layout]; bias: (out_dim,);
    A: (in_dim, rank); B: (rank, out_dim).
    """
    out_dim, in_dim = w.shape
    rank = A.shape[1]

    # v7x megacore: if a small batch collapses the M axis to one block, make
    # sure the N axis supplies >= 2 parallel blocks for layers big enough to
    # split cleanly (no-op on single-TC v5e/v6e).
    min_n_blocks = 2 if out_dim >= 512 else 1
    tn, n_pad = _pick_tile(out_dim, tn, 128, min_blocks=min_n_blocks)
    tk, k_pad = _pick_tile(in_dim, tk, 128)
    r_pad = _round_up(rank, 128)

    return dict(
        w=_pad2(w, n_pad, k_pad).astype(jnp.bfloat16),                 # (N, K)
        bias=_pad2(bias.astype(jnp.float32).reshape(1, out_dim), 1, n_pad),
        a=_pad2(A.astype(jnp.float32), k_pad, r_pad),                  # (K, r)
        b=_pad2(B.astype(jnp.float32), r_pad, n_pad),                  # (r, N)
        out_dim=out_dim, in_dim=in_dim,
        tn=tn, tk=tk, n_pad=n_pad, k_pad=k_pad, r_pad=r_pad)


def layer_with_lora_forward(x, params, alpha, *, tm=512, out_dtype=None):
    """x: (M, in_dim); params: from prepare_lora_params; alpha: scalar."""
    M, in_dim = x.shape
    assert in_dim == params["in_dim"]
    tn, tk = params["tn"], params["tk"]
    n_pad, k_pad, r_pad = params["n_pad"], params["k_pad"], params["r_pad"]
    out_dim = params["out_dim"]
    out_dtype = out_dtype or x.dtype

    tm, m_pad = _pick_tile(M, tm, 8)

    x_pad = _pad2(x.astype(jnp.float32), m_pad, k_pad)
    # LoRA down-projection hoisted out of the kernel's K loop: computed once
    # per call (2*M*K*rank FLOPs) instead of once per (j, k) grid step.
    xa = jnp.dot(x_pad, params["a"], preferred_element_type=jnp.float32)
    x_p = x_pad.astype(jnp.bfloat16)
    alpha_arr = jnp.full((1, 1), alpha, dtype=jnp.float32)

    grid = (m_pad // tm, n_pad // tn, k_pad // tk)

    out = pl.pallas_call(
        lora_linear_kernel,
        out_shape=jax.ShapeDtypeStruct((m_pad, n_pad), out_dtype),
        grid=grid,
        in_specs=[
            pl.BlockSpec(memory_space=pltpu.MemorySpace.SMEM),   # alpha (1,1)
            pl.BlockSpec((tm, tk), lambda i, j, k: (i, k)),      # x (bf16)
            pl.BlockSpec((tn, tk), lambda i, j, k: (j, k)),      # W (out, in)
            pl.BlockSpec((1, tn), lambda i, j, k: (0, j)),       # bias (f32)
            pl.BlockSpec((tm, r_pad), lambda i, j, k: (i, 0)),   # x @ A (f32)
            pl.BlockSpec((r_pad, tn), lambda i, j, k: (0, j)),   # B (f32)
        ],
        out_specs=pl.BlockSpec((tm, tn), lambda i, j, k: (i, j)),
        scratch_shapes=[
            pltpu.VMEM((tm, tn), jnp.float32),     # x @ W^T accumulator
        ],
        compiler_params=pltpu.CompilerParams(
            dimension_semantics=("parallel", "parallel", "arbitrary"),
            vmem_limit_bytes=48 * 1024 * 1024),
    )(alpha_arr, x_p, params["w"], params["bias"], xa, params["b"])

    return out[:M, :out_dim]


if __name__ == "__main__":

    def run_case(key, batch, in_dim, out_dim, rank, alpha,
                 tm=512, tn=512, tk=1024):
        kx, kw, kb, ka, kB = jax.random.split(key, 5)
        x = jax.random.normal(kx, (batch, in_dim), dtype=jnp.float32)
        w = jax.random.normal(kw, (out_dim, in_dim), dtype=jnp.float32) * 0.1
        bias = jax.random.normal(kb, (out_dim,), dtype=jnp.float32) * 0.1
        A = (jax.random.normal(ka, (in_dim, rank), dtype=jnp.float32)
             / jnp.sqrt(float(rank)))
        # NOTE: LoraLayer.__init__ sets B = zeros; use small random values so
        # the LoRA path is actually exercised (shapes match the module).
        B = jax.random.normal(kB, (rank, out_dim), dtype=jnp.float32) * 0.05

        params = prepare_lora_params(w, bias, A, B, tn=tn, tk=tk)
        out = jax.block_until_ready(
            layer_with_lora_forward(x, params, alpha, tm=tm))
        assert out.shape == (batch, out_dim)

        # Reference: base path mirrors bf16 MXU inputs (f32 accumulate); the
        # LoRA branch is kept in f32 end-to-end, matching the kernel.
        r = lambda v: v.astype(jnp.bfloat16).astype(jnp.float32)
        ref = r(x) @ r(w).T + bias + alpha * ((x @ A) @ B)
        err = jnp.max(jnp.abs(out - ref))
        assert jnp.all(jnp.isfinite(out))
        assert jnp.allclose(out, ref, atol=3e-2, rtol=3e-2), f"max abs err {err}"

    key = jax.random.PRNGKey(0)
    k1, k2 = jax.random.split(key)

    # Small shape consistent with Linear(32, 32), rank=4 (single grid step).
    run_case(k1, batch=8, in_dim=32, out_dim=32, rank=4, alpha=2.0)
    # Slightly larger shape with small tiles to exercise the full 3-D grid
    # (2 M blocks x 2 N blocks x 3-step K reduction).
    run_case(k2, batch=64, in_dim=384, out_dim=256, rank=8, alpha=0.5,
             tm=32, tn=128, tk=128)

    print("KERNEL_OK")
</pallas_src>

<mosaic_0001>
module attributes {stable_mosaic.version = 11 : i64} {
  func.func @lora_linear_kernel(%arg0: i32, %arg1: i32, %arg2: i32, %arg3: memref<1x1xf32, #tpu.memory_space<smem>>, %arg4: memref<8x128xbf16, #tpu.memory_space<vmem>>, %arg5: memref<128x128xbf16, #tpu.memory_space<vmem>>, %arg6: memref<1x128xf32, #tpu.memory_space<vmem>>, %arg7: memref<8x128xf32, #tpu.memory_space<vmem>>, %arg8: memref<128x128xf32, #tpu.memory_space<vmem>>, %arg9: memref<8x128xf32, #tpu.memory_space<vmem>>, %arg10: memref<8x128xf32, #tpu.memory_space<vmem>>) attributes {dimension_semantics = [#tpu.dimension_semantics<parallel>, #tpu.dimension_semantics<parallel>, #tpu.dimension_semantics<arbitrary>], iteration_bounds = array<i64: 1, 1, 1>, scalar_prefetch = 0 : i64, scratch_operands = 1 : i64, tpu.core_type = #tpu.core_type<tc>, window_params = [{transform_indices = @transform_0, window_bounds = array<i64: 1, 1>}, {transform_indices = @transform_1, window_bounds = array<i64: 8, 128>}, {transform_indices = @transform_2, window_bounds = array<i64: 128, 128>}, {transform_indices = @transform_3, window_bounds = array<i64: 1, 128>}, {transform_indices = @transform_4, window_bounds = array<i64: 8, 128>}, {transform_indices = @transform_5, window_bounds = array<i64: 128, 128>}, {transform_indices = @transform_6, window_bounds = array<i64: 8, 128>}]} {
    %c0 = arith.constant 0 : index
    %c0_0 = arith.constant 0 : index
    %0 = vector.load %arg4[%c0, %c0_0] : memref<8x128xbf16, #tpu.memory_space<vmem>>, vector<8x128xbf16>
    %c0_1 = arith.constant 0 : index
    %c0_2 = arith.constant 0 : index
    %1 = vector.load %arg5[%c0_1, %c0_2] : memref<128x128xbf16, #tpu.memory_space<vmem>>, vector<128x128xbf16>
    %cst = arith.constant dense<0.000000e+00> : vector<8x128xf32>
    %2 = tpu.matmul %0, %1, %cst {dimension_numbers = #tpu.dot_dimension_numbers<[1], [1], [0], [0], [0, 0, 1, 0], [], []>} : vector<8x128xbf16>, vector<128x128xbf16>, vector<8x128xf32> -> vector<8x128xf32>
    %c0_i32 = arith.constant 0 : i32
    %3 = arith.cmpi eq, %arg2, %c0_i32 : i32
    %4 = arith.extui %3 : i1 to i32
    %c0_i32_3 = arith.constant 0 : i32
    %5 = arith.cmpi ne, %4, %c0_i32_3 : i32
    scf.if %5 {
      %c0_8 = arith.constant 0 : index
      %c0_9 = arith.constant 0 : index
      %12 = vector.load %arg6[%c0_8, %c0_9] : memref<1x128xf32, #tpu.memory_space<vmem>>, vector<1x128xf32>
      %13 = vector.broadcast %12 : vector<1x128xf32> to vector<8x128xf32>
      %14 = arith.addf %2, %13 : vector<8x128xf32>
      %c0_10 = arith.constant 0 : index
      %c0_11 = arith.constant 0 : index
      %15 = vector.load %arg10[%c0_10, %c0_11] : memref<8x128xf32, #tpu.memory_space<vmem>>, vector<8x128xf32>
      tpu.vector_store %arg10[%c0_10, %c0_11], %14 {strides = array<i32>} : memref<8x128xf32, #tpu.memory_space<vmem>>, vector<8x128xf32>,
    } else {
    }
    %c0_i32_4 = arith.constant 0 : i32
    %6 = arith.cmpi sgt, %arg2, %c0_i32_4 : i32
    %7 = arith.extui %6 : i1 to i32
    %c0_i32_5 = arith.constant 0 : i32
    %8 = arith.cmpi ne, %7, %c0_i32_5 : i32
    scf.if %8 {
      %c0_8 = arith.constant 0 : index
      %c0_9 = arith.constant 0 : index
      %12 = vector.load %arg10[%c0_8, %c0_9] : memref<8x128xf32, #tpu.memory_space<vmem>>, vector<8x128xf32>
      %13 = arith.addf %12, %2 : vector<8x128xf32>
      %c0_10 = arith.constant 0 : index
      %c0_11 = arith.constant 0 : index
      %14 = vector.load %arg10[%c0_10, %c0_11] : memref<8x128xf32, #tpu.memory_space<vmem>>, vector<8x128xf32>
      tpu.vector_store %arg10[%c0_10, %c0_11], %13 {strides = array<i32>} : memref<8x128xf32, #tpu.memory_space<vmem>>, vector<8x128xf32>,
    } else {
    }
    %c0_i32_6 = arith.constant 0 : i32
    %9 = arith.cmpi eq, %arg2, %c0_i32_6 : i32
    %10 = arith.extui %9 : i1 to i32
    %c0_i32_7 = arith.constant 0 : i32
    %11 = arith.cmpi ne, %10, %c0_i32_7 : i32
    scf.if %11 {
      %c0_8 = arith.constant 0 : index
      %c0_9 = arith.constant 0 : index
      %12 = vector.load %arg7[%c0_8, %c0_9] : memref<8x128xf32, #tpu.memory_space<vmem>>, vector<8x128xf32>
      %c0_10 = arith.constant 0 : index
      %c0_11 = arith.constant 0 : index
      %13 = vector.load %arg8[%c0_10, %c0_11] : memref<128x128xf32, #tpu.memory_space<vmem>>, vector<128x128xf32>
      %cst_12 = arith.constant dense<0.000000e+00> : vector<8x128xf32>
      %14 = tpu.matmul %12, %13, %cst_12 {dimension_numbers = #tpu.dot_dimension_numbers<[1], [0], [0], [1], [0, 0, 1, 1], [], []>} : vector<8x128xf32>, vector<128x128xf32>, vector<8x128xf32> -> vector<8x128xf32>
      %c0_13 = arith.constant 0 : index
      %c0_14 = arith.constant 0 : index
      %15 = vector.load %arg10[%c0_13, %c0_14] : memref<8x128xf32, #tpu.memory_space<vmem>>, vector<8x128xf32>
      %c0_15 = arith.constant 0 : index
      %c0_16 = arith.constant 0 : index
      %16 = memref.load %arg3[%c0_15, %c0_16] : memref<1x1xf32, #tpu.memory_space<smem>>
      %17 = vector.broadcast %16 : f32 to vector<8x128xf32>
      %18 = arith.mulf %17, %14 : vector<8x128xf32>
      %19 = arith.addf %15, %18 : vector<8x128xf32>
      %c0_17 = arith.constant 0 : index
      %c0_18 = arith.constant 0 : index
      %20 = vector.load %arg9[%c0_17, %c0_18] : memref<8x128xf32, #tpu.memory_space<vmem>>, vector<8x128xf32>
      tpu.vector_store %arg9[%c0_17, %c0_18], %19 {strides = array<i32>} : memref<8x128xf32, #tpu.memory_space<vmem>>, vector<8x128xf32>,
    } else {
    }
    return
  }
  func.func @transform_0(%arg0: i32, %arg1: i32, %arg2: i32) -> (i32, i32) {
    %c0_i32 = arith.constant 0 : i32
    %c0_i32_0 = arith.constant 0 : i32
    %c0_i32_1 = arith.constant 0 : i32
    return %c0_i32, %c0_i32_0 : i32, i32
  }
  func.func @transform_1(%arg0: i32, %arg1: i32, %arg2: i32) -> (i32, i32) {
    %c0_i32 = arith.constant 0 : i32
    return %arg0, %arg2 : i32, i32
  }
  func.func @transform_2(%arg0: i32, %arg1: i32, %arg2: i32) -> (i32, i32) {
    %c0_i32 = arith.constant 0 : i32
    return %arg1, %arg2 : i32, i32
  }
  func.func @transform_3(%arg0: i32, %arg1: i32, %arg2: i32) -> (i32, i32) {
    %c0_i32 = arith.constant 0 : i32
    %c0_i32_0 = arith.constant 0 : i32
    return %c0_i32, %arg1 : i32, i32
  }
  func.func @transform_4(%arg0: i32, %arg1: i32, %arg2: i32) -> (i32, i32) {
    %c0_i32 = arith.constant 0 : i32
    %c0_i32_0 = arith.constant 0 : i32
    return %arg0, %c0_i32 : i32, i32
  }
  func.func @transform_5(%arg0: i32, %arg1: i32, %arg2: i32) -> (i32, i32) {
    %c0_i32 = arith.constant 0 : i32
    %c0_i32_0 = arith.constant 0 : i32
    return %c0_i32, %arg1 : i32, i32
  }
  func.func @transform_6(%arg0: i32, %arg1: i32, %arg2: i32) -> (i32, i32) {
    %c0_i32 = arith.constant 0 : i32
    return %arg0, %arg1 : i32, i32
  }
}

</mosaic_0001>

<llo_original>
// kernel: tpu_custom_call.1
$region0: #{tpu_custom_call.1}
  #allocation0 [shape = 'u32[]', space=smem, size = 0x4, offset = 0x4, fixed_abs, tag = 'smem constant byte address 0x4 - core index']
  #allocation1 [shape = 'u32[144,128]{1,0:T(1,128)}', space=vmem, size = 0x12000, scoped, tag = 'internal scratch']
  #allocation2 [shape = 'f32[8,128]{1,0:T(8,128)}', space=vmem, size = 0x1000, scoped, tag = 'scratch operand']
  #allocation3 [shape = 'f32[1,1]{1,0:T(1,128)S(6)}', space=smem, size = 0x200, scoped, tag = 'scoped memory for tpu_custom_call.1']
  %s0 = inlined_call_operand.<no memory space> [shape: f32[1,1], index: 0, kind: input, shape index: {}]
  %s1 = inlined_call_operand.hbm [shape: bf16[8,128], index: 1, kind: input, shape index: {}]
  %s2 = inlined_call_operand.hbm [shape: bf16[128,128], index: 2, kind: input, shape index: {}]
  %s3 = inlined_call_operand.vmem [shape: f32[1,128], index: 3, kind: input, shape index: {}]
  %s4 = inlined_call_operand.hbm [shape: f32[8,128], index: 4, kind: input, shape index: {}]
  %s5 = inlined_call_operand.hbm [shape: f32[128,128], index: 5, kind: input, shape index: {}]
  %s6 = inlined_call_operand.hbm [shape: f32[8,128], index: 6, kind: output, shape index: {}]
  %s7 = sld [smem:[#allocation0]]
  $region62: #{tpu_custom_call.1} parent=0
    _
  %s9 = ssub.s32 1, %s7
  %s10 = scalar_select 0, %s9, %s7
  %11 = sst [smem:[#allocation3]] %s0
  $region1: #{tpu_custom_call.1} parent=0
    #allocation4 [shape = 'u8[2048]{0}', space=vmem, size = 0x800, scoped, tag = 'input window, operand 1, single buffered']
    #allocation5 [shape = 's32[1]{0}', space=sflag, size = 0x4, scoped, tag = 'scoped memory for tpu_custom_call.1']
    #allocation6 [shape = 's32[1]{0}', space=sflag, size = 0x4, scoped, tag = 'scoped memory for tpu_custom_call.1']
    #allocation7 [shape = 'u8[32768]{0}', space=vmem, size = 0x8000, scoped, tag = 'input window, operand 2, single buffered']
    #allocation8 [shape = 's32[1]{0}', space=sflag, size = 0x4, scoped, tag = 'scoped memory for tpu_custom_call.1']
    #allocation9 [shape = 'u8[4096]{0}', space=vmem, size = 0x1000, scoped, tag = 'input window, operand 4, single buffered']
    #allocation10 [shape = 'u8[65536]{0}', space=vmem, size = 0x10000, scoped, tag = 'input window, operand 5, single buffered']
    #allocation11 [shape = 's32[1]{0}', space=sflag, size = 0x4, scoped, tag = 'scoped memory for tpu_custom_call.1']
    #allocation12 [shape = 'u8[4096]{0}', space=vmem, size = 0x1000, scoped, tag = 'output window, operand 0, single buffered']
    %12 = vsyncpa [#allocation5], 0
    %13 = vsyncpa [#allocation8], 0
    %14 = vsyncpa [#allocation11], 0
    %15 = vsyncpa [#allocation6], 0
    // Predicated region
    $region2: #{tpu_custom_call.1} parent=1 // pred_check
      _
    $region3: #{tpu_custom_call.1} parent=1 // pred_check_branch
      %17 = sbr.rel (0) target = $region5
    $region4: #{tpu_custom_call.1} parent=1 // pred_region
      _
    $region5: #{tpu_custom_call.1} parent=1 // pred_fallthru
      _
    // Predicated region
    $region6: #{tpu_custom_call.1} parent=1 // pred_check
      _
    $region7: #{tpu_custom_call.1} parent=1 // pred_check_branch
      %19 = sbr.rel (0) target = $region9
    $region8: #{tpu_custom_call.1} parent=1 // pred_region
      %s21 = ssub.s32 64, 64
      %22 = vsyncadd [#allocation5], %s21
      %s24 = sshll.u32 [#allocation4], 4
      %s25 = int_to_ptr.vmem [resolvable:$true] %s24
      %27 = dma.hbm_to_vmem [thread:$0]  %s1, 64, %s25, [#allocation5]
    $region9: #{tpu_custom_call.1} parent=1 // pred_fallthru
      _
    // Predicated region
    $region10: #{tpu_custom_call.1} parent=1 // pred_check
      _
    $region11: #{tpu_custom_call.1} parent=1 // pred_check_branch
      %29 = sbr.rel (0) target = $region13
    $region12: #{tpu_custom_call.1} parent=1 // pred_region
      %s31 = ssub.s32 1024, 1024
      %32 = vsyncadd [#allocation8], %s31
      %s33 = sshll.u32 [#allocation7], 4
      %s34 = int_to_ptr.vmem [resolvable:$true] %s33
      %39 = dma.hbm_to_vmem [thread:$0]  %s2, 1024, %s34, [#allocation8], 64, 64, 4
    $region13: #{tpu_custom_call.1} parent=1 // pred_fallthru
      _
    // Predicated region
    $region14: #{tpu_custom_call.1} parent=1 // pred_check
      _
    $region15: #{tpu_custom_call.1} parent=1 // pred_check_branch
      %41 = sbr.rel (0) target = $region17
    $region16: #{tpu_custom_call.1} parent=1 // pred_region
      _
    $region17: #{tpu_custom_call.1} parent=1 // pred_fallthru
      _
    // Predicated region
    $region18: #{tpu_custom_call.1} parent=1 // pred_check
      _
    $region19: #{tpu_custom_call.1} parent=1 // pred_check_branch
      %43 = sbr.rel (0) target = $region21
    $region20: #{tpu_custom_call.1} parent=1 // pred_region
      %s45 = ssub.s32 128, 128
      %46 = vsyncadd [#allocation8], %s45
      %s48 = sshll.u32 [#allocation9], 4
      %s49 = int_to_ptr.vmem [resolvable:$true] %s48
      %51 = dma.hbm_to_vmem [thread:$0]  %s4, 128, %s49, [#allocation8]
    $region21: #{tpu_custom_call.1} parent=1 // pred_fallthru
      _
    // Predicated region
    $region22: #{tpu_custom_call.1} parent=1 // pred_check
      _
    $region23: #{tpu_custom_call.1} parent=1 // pred_check_branch
      %53 = sbr.rel (0) target = $region25
    $region24: #{tpu_custom_call.1} parent=1 // pred_region
      %s55 = ssub.s32 2048, 2048
      %56 = vsyncadd [#allocation11], %s55
      %s57 = sshll.u32 [#allocation10], 4
      %s58 = int_to_ptr.vmem [resolvable:$true] %s57
      %63 = dma.hbm_to_vmem [thread:$0]  %s5, 2048, %s58, [#allocation11], 128, 128, 8
    $region25: #{tpu_custom_call.1} parent=1 // pred_fallthru
      _
    // Predicated region
    $region26: #{tpu_custom_call.1} parent=1 // pred_check
      _
    $region27: #{tpu_custom_call.1} parent=1 // pred_check_branch
      %65 = sbr.rel (0) target = $region29
    $region28: #{tpu_custom_call.1} parent=1 // pred_region
      %66 = dma.done [#allocation5], 64
    $region29: #{tpu_custom_call.1} parent=1 // pred_fallthru
      _
    // Predicated region
    $region30: #{tpu_custom_call.1} parent=1 // pred_check
      _
    $region31: #{tpu_custom_call.1} parent=1 // pred_check_branch
      %68 = sbr.rel (0) target = $region33
    $region32: #{tpu_custom_call.1} parent=1 // pred_region
      %69 = dma.done [#allocation8], 1024
    $region33: #{tpu_custom_call.1} parent=1 // pred_fallthru
      _
    // Predicated region
    $region34: #{tpu_custom_call.1} parent=1 // pred_check
      _
    $region35: #{tpu_custom_call.1} parent=1 // pred_check_branch
      %71 = sbr.rel (0) target = $region37
    $region36: #{tpu_custom_call.1} parent=1 // pred_region
      %72 = dma.done [#allocation8], 128
    $region37: #{tpu_custom_call.1} parent=1 // pred_fallthru
      _
    // Predicated region
    $region38: #{tpu_custom_call.1} parent=1 // pred_check
      _
    $region39: #{tpu_custom_call.1} parent=1 // pred_check_branch
      %74 = sbr.rel (0) target = $region41
    $region40: #{tpu_custom_call.1} parent=1 // pred_region
      %75 = dma.done [#allocation11], 2048
    $region41: #{tpu_custom_call.1} parent=1 // pred_fallthru
      _
    %v77 = vld [vmem:[#allocation4] sm:$0xf]
    %v78 = vld [vmem:[#allocation7] sm:$0xf]
    %v79 = vld [vmem:[#allocation7 + $0x4] sm:$0xf]
    %v80 = vld [vmem:[#allocation7 + $0x8] sm:$0xf]
    %v81 = vld [vmem:[#allocation7 + $0xc] sm:$0xf]
    %v82 = vld [vmem:[#allocation7 + $0x10] sm:$0xf]
    %v83 = vld [vmem:[#allocation7 + $0x14] sm:$0xf]
    %v84 = vld [vmem:[#allocation7 + $0x18] sm:$0xf]
    %v85 = vld [vmem:[#allocation7 + $0x1c] sm:$0xf]
    %v86 = vld [vmem:[#allocation7 + $0x20] sm:$0xf]
    %v87 = vld [vmem:[#allocation7 + $0x24] sm:$0xf]
    %v88 = vld [vmem:[#allocation7 + $0x28] sm:$0xf]
    %v89 = vld [vmem:[#allocation7 + $0x2c] sm:$0xf]
    %v90 = vld [vmem:[#allocation7 + $0x30] sm:$0xf]
    %v91 = vld [vmem:[#allocation7 + $0x34] sm:$0xf]
    %v92 = vld [vmem:[#allocation7 + $0x38] sm:$0xf]
    %v93 = vld [vmem:[#allocation7 + $0x3c] sm:$0xf]
    %v110 = vunpack.c.l.b16 %v78
    %v111 = vunpack.c.l.b16 %v79
    %v112 = vunpack.c.l.b16 %v80
    %v113 = vunpack.c.l.b16 %v81
    %v114 = vunpack.c.l.b16 %v82
    %v115 = vunpack.c.l.b16 %v83
    %v116 = vunpack.c.l.b16 %v84
    %v117 = vunpack.c.l.b16 %v85
    %v118 = vunpack.c.l.b16 %v86
    %v119 = vunpack.c.l.b16 %v87
    %v120 = vunpack.c.l.b16 %v88
    %v121 = vunpack.c.l.b16 %v89
    %v122 = vunpack.c.l.b16 %v90
    %v123 = vunpack.c.l.b16 %v91
    %v124 = vunpack.c.l.b16 %v92
    %v125 = vunpack.c.l.b16 %v93
    %v126 = vpack.c.b16 %v111, %v110
    %v127 = vpack.c.b16 %v113, %v112
    %v128 = vpack.c.b16 %v115, %v114
    %v129 = vpack.c.b16 %v117, %v116
    %v130 = vpack.c.b16 %v119, %v118
    %v131 = vpack.c.b16 %v121, %v120
    %v132 = vpack.c.b16 %v123, %v122
    %v133 = vpack.c.b16 %v125, %v124
    %142 = vmatprep.subr.bf16.mxu0 0
    %143 = vmatpush1.bf16.xpose.msra.mxu0 %v133
    %144 = vmatprep.subr.bf16.mxu0 0
    %145 = vmatpush1.bf16.xpose.msra.mxu0 %v132
    %146 = vmatprep.subr.bf16.mxu0 0
    %147 = vmatpush1.bf16.xpose.msra.mxu0 %v131
    %148 = vmatprep.subr.bf16.mxu0 0
    %149 = vmatpush1.bf16.xpose.msra.mxu0 %v130
    %150 = vmatprep.subr.bf16.mxu0 0
    %151 = vmatpush1.bf16.xpose.msra.mxu0 %v129
    %152 = vmatprep.subr.bf16.mxu0 0
    %153 = vmatpush1.bf16.xpose.msra.mxu0 %v128
    %154 = vmatprep.subr.bf16.mxu0 0
    %155 = vmatpush1.bf16.xpose.msra.mxu0 %v127
    %156 = vmatprep.subr.bf16.mxu0 0
    %157 = vmatpush1.bf16.xpose.msra.mxu0 %v126
    %158 = vmatprep.subr.bf16.mxu0 0
    %159 = vmatpush2.bf16.xpose.msra.mxu0 0
    %160 = vmatprep.subr.bf16.mxu0 0
    %161 = vmatpush2.bf16.xpose.msra.mxu0 0
    %162 = vmatprep.subr.bf16.mxu0 0
    %163 = vmatpush2.bf16.xpose.msra.mxu0 0
    %164 = vmatprep.subr.bf16.mxu0 0
    %165 = vmatpush2.bf16.xpose.msra.mxu0 0
    %166 = vmatprep.subr.bf16.mxu0 0
    %167 = vmatpush2.bf16.xpose.msra.mxu0 0
    %168 = vmatprep.subr.bf16.mxu0 0
    %169 = vmatpush2.bf16.xpose.msra.mxu0 0
    %170 = vmatprep.subr.bf16.mxu0 0
    %171 = vmatpush2.bf16.xpose.msra.mxu0 0
    %172 = vmatprep.subr.bf16.mxu0 0
    %173 = vmatpush2.bf16.xpose.msra.mxu0 0
    %174 = vmatprep.mubr.bf16.mxu0 0
    %175 = vmatmul.mubr.bf16.gmra.mxu0 %v77
    %v176 = vpop.f32.mrf.mxu0
    %v177 = vadd.f32 0.0, %v176
    %v178 = vpop.f32.mrf.mxu0
    %v179 = vpop.f32.mrf.mxu0
    %v180 = vpop.f32.mrf.mxu0
    %181 = vdwg.mxu0
    %p182 = scmp.eq.s32.totalorder 0, 0
    // Predicated region
    $region42: #{tpu_custom_call.1} parent=1 // pred_check
      %p183 = pneg %p182
    $region43: #{tpu_custom_call.1} parent=1 // pred_check_branch
      %185 = sbr.rel (%p183) target = $region45
    $region44: #{tpu_custom_call.1} parent=1 // pred_region
      %v186 = vld [vmem:[%s3] sm:$0x1]
      %v188 = vlaneseq
      %v189 = vshrl.u32 %v188, 7
      %v190 = vsub.s32 0, %v189
      %v191 = vrot.slane %v186, %v190
      %v193 = vadd.f32 %v177, %v191
      %194 = vst [vmem:[#allocation2] sm:$0xff] %v193
    $region45: #{tpu_custom_call.1} parent=1 // pred_fallthru
      _
    %p195 = scmp.gt.s32.totalorder 0, 0
    // Predicated region
    $region46: #{tpu_custom_call.1} parent=1 // pred_check
      %p196 = pneg %p195
    $region47: #{tpu_custom_call.1} parent=1 // pred_check_branch
      %198 = sbr.rel (%p196) target = $region49
    $region48: #{tpu_custom_call.1} parent=1 // pred_region
      %v199 = vld [vmem:[#allocation2] sm:$0xff]
      %v200 = vadd.f32 %v199, %v177
      %201 = vst [vmem:[#allocation2] sm:$0xff] %v200
    $region49: #{tpu_custom_call.1} parent=1 // pred_fallthru
      _
    // Predicated region
    $region50: #{tpu_custom_call.1} parent=1 // pred_check
      %p202 = pneg %p182
    $region51: #{tpu_custom_call.1} parent=1 // pred_check_branch
      %204 = sbr.rel (%p202) target = $region53
    $region52: #{tpu_custom_call.1} parent=1 // pred_region
      %v205 = vld [vmem:[#allocation9] sm:$0xff]
      %v206 = vld [vmem:[#allocation10] sm:$0xff]
      %v207 = vld [vmem:[#allocation10 + $0x8] sm:$0xff]
      %v208 = vld [vmem:[#allocation10 + $0x10] sm:$0xff]
      %v209 = vld [vmem:[#allocation10 + $0x18] sm:$0xff]
      %v210 = vld [vmem:[#allocation10 + $0x20] sm:$0xff]
      %v211 = vld [vmem:[#allocation10 + $0x28] sm:$0xff]
      %v212 = vld [vmem:[#allocation10 + $0x30] sm:$0xff]
      %v213 = vld [vmem:[#allocation10 + $0x38] sm:$0xff]
      %v214 = vld [vmem:[#allocation10 + $0x40] sm:$0xff]
      %v215 = vld [vmem:[#allocation10 + $0x48] sm:$0xff]
      %v216 = vld [vmem:[#allocation10 + $0x50] sm:$0xff]
      %v217 = vld [vmem:[#allocation10 + $0x58] sm:$0xff]
      %v218 = vld [vmem:[#allocation10 + $0x60] sm:$0xff]
      %v219 = vld [vmem:[#allocation10 + $0x68] sm:$0xff]
      %v220 = vld [vmem:[#allocation10 + $0x70] sm:$0xff]
      %v221 = vld [vmem:[#allocation10 + $0x78] sm:$0xff]
      %222 = vmatprep.subr.mxu0 0.0
      %223 = vmatpush1.msra.mxu0 %v221
      %224 = vmatprep.subr.mxu0 0.0
      %225 = vmatpush1.msra.mxu0 %v220
      %226 = vmatprep.subr.mxu0 0.0
      %227 = vmatpush1.msra.mxu0 %v219
      %228 = vmatprep.subr.mxu0 0.0
      %229 = vmatpush1.msra.mxu0 %v218
      %230 = vmatprep.subr.mxu0 0.0
      %231 = vmatpush1.msra.mxu0 %v217
      %232 = vmatprep.subr.mxu0 0.0
      %233 = vmatpush1.msra.mxu0 %v216
      %234 = vmatprep.subr.mxu0 0.0
      %235 = vmatpush1.msra.mxu0 %v215
      %236 = vmatprep.subr.mxu0 0.0
      %237 = vmatpush1.msra.mxu0 %v214
      %238 = vmatprep.subr.mxu0 0.0
      %239 = vmatpush1.msra.mxu0 %v213
      %240 = vmatprep.subr.mxu0 0.0
      %241 = vmatpush1.msra.mxu0 %v212
      %242 = vmatprep.subr.mxu0 0.0
      %243 = vmatpush1.msra.mxu0 %v211
      %244 = vmatprep.subr.mxu0 0.0
      %245 = vmatpush1.msra.mxu0 %v210
      %246 = vmatprep.subr.mxu0 0.0
      %247 = vmatpush1.msra.mxu0 %v209
      %248 = vmatprep.subr.mxu0 0.0
      %249 = vmatpush1.msra.mxu0 %v208
      %250 = vmatprep.subr.mxu0 0.0
      %251 = vmatpush1.msra.mxu0 %v207
      %252 = vmatprep.subr.mxu0 0.0
      %253 = vmatpush1.msra.mxu0 %v206
      %254 = vmatprep.subr.mxu0 0.0
      %255 = vmatpush2.msra.mxu0 0.0
      %256 = vmatprep.subr.mxu0 0.0
      %257 = vmatpush2.msra.mxu0 0.0
      %258 = vmatprep.subr.mxu0 0.0
      %259 = vmatpush2.msra.mxu0 0.0
      %260 = vmatprep.subr.mxu0 0.0
      %261 = vmatpush2.msra.mxu0 0.0
      %262 = vmatprep.subr.mxu0 0.0
      %263 = vmatpush2.msra.mxu0 0.0
      %264 = vmatprep.subr.mxu0 0.0
      %265 = vmatpush2.msra.mxu0 0.0
      %266 = vmatprep.subr.mxu0 0.0
      %267 = vmatpush2.msra.mxu0 0.0
      %268 = vmatprep.subr.mxu0 0.0
      %269 = vmatpush2.msra.mxu0 0.0
      %270 = vmatprep.subr.mxu0 0.0
      %271 = vmatpush2.msra.mxu0 0.0
      %272 = vmatprep.subr.mxu0 0.0
      %273 = vmatpush2.msra.mxu0 0.0
      %274 = vmatprep.subr.mxu0 0.0
      %275 = vmatpush2.msra.mxu0 0.0
      %276 = vmatprep.subr.mxu0 0.0
      %277 = vmatpush2.msra.mxu0 0.0
      %278 = vmatprep.subr.mxu0 0.0
      %279 = vmatpush2.msra.mxu0 0.0
      %280 = vmatprep.subr.mxu0 0.0
      %281 = vmatpush2.msra.mxu0 0.0
      %282 = vmatprep.subr.mxu0 0.0
      %283 = vmatpush2.msra.mxu0 0.0
      %284 = vmatprep.subr.mxu0 0.0
      %285 = vmatpush2.msra.mxu0 0.0
      %286 = vmatprep.mubr.f32.mxu0 0.0
      %287 = vmatmul.mubr.f32.gmra.mxu0 %v205
      %v288 = vpop.f32.mrf.mxu0
      %v289 = vadd.f32 0.0, %v288
      %v290 = vpop.f32.mrf.mxu0
      %291 = vdwg.mxu0
      %v292 = vld [vmem:[#allocation2] sm:$0xff]
      %s293 = sld [smem:[#allocation3]]
      %v294 = vstv %s293
      %v295 = vmul.f32 %v294, %v289
      %v296 = vadd.f32 %v292, %v295
      %297 = vst [vmem:[#allocation12] sm:$0xff] %v296
    $region53: #{tpu_custom_call.1} parent=1 // pred_fallthru
      _
    // Predicated region
    $region54: #{tpu_custom_call.1} parent=1 // pred_check
      _
    $region55: #{tpu_custom_call.1} parent=1 // pred_check_branch
      %299 = sbr.rel (0) target = $region57
    $region56: #{tpu_custom_call.1} parent=1 // pred_region
      %s301 = ssub.s32 128, 128
      %302 = vsyncadd [#allocation6], %s301
      %s304 = sshll.u32 [#allocation12], 4
      %s305 = int_to_ptr.vmem [resolvable:$true] %s304
      %307 = dma.vmem_to_hbm [thread:$0]  %s305, 128, %s6, [#allocation6]
    $region57: #{tpu_custom_call.1} parent=1 // pred_fallthru
      _
    // Predicated region
    $region58: #{tpu_custom_call.1} parent=1 // pred_check
      _
    $region59: #{tpu_custom_call.1} parent=1 // pred_check_branch
      %309 = sbr.rel (0) target = $region61
    $region60: #{tpu_custom_call.1} parent=1 // pred_region
      %310 = dma.done [#allocation6], 128
    $region61: #{tpu_custom_call.1} parent=1 // pred_fallthru
      _
    %311 = vsyncpa [#allocation5], 1
    %312 = vsyncpa [#allocation8], 1
    %313 = vsyncpa [#allocation11], 1
    %314 = vsyncpa [#allocation6], 1

</llo_original>
